<compile_context>
chip_gen: v7x
topology: tpu7x:2x2x1
jax: 0.10.0
libtpu: 0.0.40
codegen_flags: <defaults>
</compile_context>

<pallas_src>
import functools

import jax
import jax.numpy as jnp
from jax.experimental import pallas as pl
from jax.experimental.pallas import tpu as pltpu


# ----------------------------- fused Pallas kernel ---------------------------
def fused_nbeats_kernel(x0_ref, a_ref,
                        w1_ref, b1_ref, w2_ref, b2_ref, wb_ref, wf_ref,
                        sum_b_ref, fore_ref,
                        x_scr):
    """One grid step == one N-BEATS block of the doubly-residual stack.

    x0   : (N, L_back)   original node time series (read only at block 0)
    a    : (N, N)        normalized adjacency
    w1   : (L_back, H)   b1: (1, H)
    w2   : (H, H)        b2: (1, H)
    wb   : (H, L_back)   pre-fused  Wtb @ Bb
    wf   : (H, L_fore)   pre-fused  Wtf @ Bf
    sum_b: (N, L_back)   output accumulator (VMEM-resident across blocks)
    fore : (N, L_fore)   output accumulator (VMEM-resident across blocks)
    x_scr: (N, L_back)   VMEM scratch holding the residual backcast
    """
    blk = pl.program_id(0)

    @pl.when(blk == 0)
    def _():
        x_scr[...] = x0_ref[...]
        sum_b_ref[...] = jnp.zeros_like(sum_b_ref)
        fore_ref[...] = jnp.zeros_like(fore_ref)

    a = a_ref[...]
    x = x_scr[...]

    # layer 1: GCN + ReLU   relu((A @ x) @ W1 + b1)   (== A @ (x @ W1) + b1)
    ax = jnp.dot(a, x, preferred_element_type=jnp.float32)
    h = jnp.dot(ax, w1_ref[...], preferred_element_type=jnp.float32) + b1_ref[...]
    h = jnp.maximum(h, 0.0)

    # layer 2: GCN + ReLU   relu((A @ h) @ W2 + b2)
    ah = jnp.dot(a, h, preferred_element_type=jnp.float32)
    h = jnp.dot(ah, w2_ref[...], preferred_element_type=jnp.float32) + b2_ref[...]
    h = jnp.maximum(h, 0.0)

    # fused theta projection + basis expansion
    b = jnp.dot(h, wb_ref[...], preferred_element_type=jnp.float32)
    f = jnp.dot(h, wf_ref[...], preferred_element_type=jnp.float32)

    # doubly-residual updates (all state stays in VMEM across the block axis)
    x_scr[...] = x - b
    sum_b_ref[...] = sum_b_ref[...] + b
    fore_ref[...] = fore_ref[...] + f


def n_model_forward(backcast, adjacency, packed, forecast_length):
    """Single pallas_call over the whole stack. Returns (sum_of_backcast, forecast)."""
    W1s, b1s, W2s, b2s, Wbs, Wfs = packed
    num_blocks, Lb, H = W1s.shape
    N = backcast.shape[0]
    Lf = forecast_length

    grid_spec = pltpu.PrefetchScalarGridSpec(
        num_scalar_prefetch=0,
        grid=(num_blocks,),
        in_specs=[
            pl.BlockSpec((N, Lb), lambda i: (0, 0)),        # backcast (resident)
            pl.BlockSpec((N, N), lambda i: (0, 0)),         # adjacency (resident)
            pl.BlockSpec((None, Lb, H), lambda i: (i, 0, 0)),   # W1[i]
            pl.BlockSpec((None, 1, H), lambda i: (i, 0, 0)),    # b1[i]
            pl.BlockSpec((None, H, H), lambda i: (i, 0, 0)),    # W2[i]
            pl.BlockSpec((None, 1, H), lambda i: (i, 0, 0)),    # b2[i]
            pl.BlockSpec((None, H, Lb), lambda i: (i, 0, 0)),   # Wtb@Bb [i]
            pl.BlockSpec((None, H, Lf), lambda i: (i, 0, 0)),   # Wtf@Bf [i]
        ],
        out_specs=(
            pl.BlockSpec((N, Lb), lambda i: (0, 0)),        # sum_of_backcast
            pl.BlockSpec((N, Lf), lambda i: (0, 0)),        # forecast
        ),
        scratch_shapes=[pltpu.VMEM((N, Lb), jnp.float32)],  # residual backcast
    )

    return pl.pallas_call(
        fused_nbeats_kernel,
        out_shape=(jax.ShapeDtypeStruct((N, Lb), jnp.float32),
                   jax.ShapeDtypeStruct((N, Lf), jnp.float32)),
        grid_spec=grid_spec,
        compiler_params=pltpu.CompilerParams(
            # block axis is serially dependent (residual x) -> must be arbitrary
            dimension_semantics=("arbitrary",)),
    )(backcast, adjacency, W1s, b1s, W2s, b2s, Wbs, Wfs)


# --------------------------- parameter / basis setup -------------------------
def trend_basis(thetas_dim, length):
    t = jnp.arange(length, dtype=jnp.float32) / float(length)
    return jnp.stack([t ** i for i in range(thetas_dim)], axis=0)  # (thetas_dim, length)


def seasonality_basis(thetas_dim, length):
    t = jnp.arange(length, dtype=jnp.float32) / float(length)
    p = thetas_dim
    p1 = p // 2 + p % 2          # cosine terms (incl. constant)
    p2 = p // 2                  # sine terms
    rows = [jnp.cos(2.0 * jnp.pi * i * t) for i in range(p1)]
    rows += [jnp.sin(2.0 * jnp.pi * (i + 1) * t) for i in range(p2)]
    return jnp.stack(rows, axis=0)  # (thetas_dim, length)


def make_block_params(key, stack_type, backcast_length, forecast_length,
                      hidden, generic_thetas_dim):
    if stack_type == "trend":
        tb, tf = 3, 3
    elif stack_type == "seasonality":
        tb = 2 * int(backcast_length / 2 - 1) + 1
        tf = 2 * int(forecast_length / 2 - 1) + 1
    else:  # generic
        tb, tf = generic_thetas_dim
    ks = jax.random.split(key, 8)
    s = 0.1
    p = {
        "W1": s * jax.random.normal(ks[0], (backcast_length, hidden), jnp.float32),
        "b1": s * jax.random.normal(ks[1], (1, hidden), jnp.float32),
        "W2": s * jax.random.normal(ks[2], (hidden, hidden), jnp.float32),
        "b2": s * jax.random.normal(ks[3], (1, hidden), jnp.float32),
        "Wtb": s * jax.random.normal(ks[4], (hidden, tb), jnp.float32),
        "Wtf": s * jax.random.normal(ks[5], (hidden, tf), jnp.float32),
    }
    if stack_type == "trend":
        p["Bb"] = trend_basis(tb, backcast_length)
        p["Bf"] = trend_basis(tf, forecast_length)
    elif stack_type == "seasonality":
        p["Bb"] = seasonality_basis(tb, backcast_length)
        p["Bf"] = seasonality_basis(tf, forecast_length)
    else:  # generic: learned basis
        p["Bb"] = s * jax.random.normal(ks[6], (tb, backcast_length), jnp.float32)
        p["Bf"] = s * jax.random.normal(ks[7], (tf, forecast_length), jnp.float32)
    return p


def pack_stack_params(stacks_params):
    """Stack per-block params on a leading block axis and pre-fuse theta@basis.

    Pre-fusing Wtb@Bb / Wtf@Bf makes every block's parameter shapes identical,
    so no tb/tf zero-padding is needed to stack heterogeneous block types.
    """
    flat = [bp for stack in stacks_params for bp in stack]
    W1s = jnp.stack([p["W1"] for p in flat], axis=0)
    b1s = jnp.stack([p["b1"] for p in flat], axis=0)
    W2s = jnp.stack([p["W2"] for p in flat], axis=0)
    b2s = jnp.stack([p["b2"] for p in flat], axis=0)
    Wbs = jnp.stack([p["Wtb"] @ p["Bb"] for p in flat], axis=0)  # (H, L_back)
    Wfs = jnp.stack([p["Wtf"] @ p["Bf"] for p in flat], axis=0)  # (H, L_fore)
    return W1s, b1s, W2s, b2s, Wbs, Wfs


def build_adjacency(edge_index, edge_weight, num_nodes):
    """Dense symmetric-normalized GCN adjacency with self loops."""
    a = jnp.zeros((num_nodes, num_nodes), jnp.float32)
    a = a.at[edge_index[0], edge_index[1]].add(edge_weight)
    a = a + jnp.eye(num_nodes, dtype=jnp.float32)
    d = jnp.sum(a, axis=1)
    d_inv_sqrt = 1.0 / jnp.sqrt(jnp.maximum(d, 1e-6))
    return a * d_inv_sqrt[:, None] * d_inv_sqrt[None, :]


# --------------------------- pure-JAX reference ------------------------------
def block_ref(x, a, p):
    h = jnp.maximum(a @ (x @ p["W1"]) + p["b1"], 0.0)
    h = jnp.maximum(a @ (h @ p["W2"]) + p["b2"], 0.0)
    return (h @ p["Wtb"]) @ p["Bb"], (h @ p["Wtf"]) @ p["Bf"]


def n_model_forward_ref(backcast, adjacency, stacks_params, forecast_length):
    N = backcast.shape[0]
    forecast = jnp.zeros((N, forecast_length), jnp.float32)
    sum_of_backcast = jnp.zeros_like(backcast)
    x = backcast
    for stack in stacks_params:
        for block_p in stack:
            b, f = block_ref(x, adjacency, block_p)
            x = x - b
            forecast = forecast + f
            sum_of_backcast = sum_of_backcast + b
    return sum_of_backcast, forecast


# ----------------------------------- main ------------------------------------
if __name__ == "__main__":
    # config (small, deterministic)
    backcast_length = 16
    forecast_length = 8
    hidden = 32
    generic_thetas_dim = (8, 8)
    stack_types = ["trend", "seasonality", "generic"]
    num_blocks_per_stack = 2
    num_nodes = 8          # "batch" dimension = graph nodes
    num_edges = 16

    key = jax.random.PRNGKey(0)
    k_x, k_src, k_dst, k_w, k_params = jax.random.split(key, 5)

    backcast = jax.random.normal(k_x, (num_nodes, backcast_length), jnp.float32)
    edge_index = jnp.stack([
        jax.random.randint(k_src, (num_edges,), 0, num_nodes),
        jax.random.randint(k_dst, (num_edges,), 0, num_nodes),
    ], axis=0)
    edge_weight = jax.random.uniform(k_w, (num_edges,), jnp.float32)

    adjacency = build_adjacency(edge_index, edge_weight, num_nodes)

    # build per-stack / per-block parameters deterministically
    stacks_params = []
    pkeys = jax.random.split(k_params, len(stack_types) * num_blocks_per_stack)
    ki = 0
    for st in stack_types:
        blocks = []
        for _ in range(num_blocks_per_stack):
            blocks.append(make_block_params(pkeys[ki], st, backcast_length,
                                            forecast_length, hidden,
                                            generic_thetas_dim))
            ki += 1
        stacks_params.append(blocks)

    packed = pack_stack_params(stacks_params)

    fwd = jax.jit(functools.partial(n_model_forward,
                                    forecast_length=forecast_length))
    sum_of_backcast, forecast = fwd(backcast, adjacency, packed)
    jax.block_until_ready((sum_of_backcast, forecast))

    # correctness check vs pure-JAX reference (unfused theta/basis math)
    ref_b, ref_f = n_model_forward_ref(backcast, adjacency, stacks_params,
                                       forecast_length)
    assert sum_of_backcast.shape == (num_nodes, backcast_length)
    assert forecast.shape == (num_nodes, forecast_length)
    assert jnp.allclose(sum_of_backcast, ref_b, atol=1e-4, rtol=1e-4)
    assert jnp.allclose(forecast, ref_f, atol=1e-4, rtol=1e-4)

    print("KERNEL_OK")
</pallas_src>

<mosaic_0001>
module attributes {stable_mosaic.version = 11 : i64} {
  func.func @fused_nbeats_kernel(%arg0: i32, %arg1: memref<8x16xf32, #tpu.memory_space<vmem>>, %arg2: memref<8x8xf32, #tpu.memory_space<vmem>>, %arg3: memref<1x16x32xf32, #tpu.memory_space<vmem>>, %arg4: memref<1x1x32xf32, #tpu.memory_space<vmem>>, %arg5: memref<1x32x32xf32, #tpu.memory_space<vmem>>, %arg6: memref<1x1x32xf32, #tpu.memory_space<vmem>>, %arg7: memref<1x32x16xf32, #tpu.memory_space<vmem>>, %arg8: memref<1x32x8xf32, #tpu.memory_space<vmem>>, %arg9: memref<8x16xf32, #tpu.memory_space<vmem>>, %arg10: memref<8x8xf32, #tpu.memory_space<vmem>>, %arg11: memref<8x16xf32, #tpu.memory_space<vmem>>) attributes {dimension_semantics = [#tpu.dimension_semantics<arbitrary>], iteration_bounds = array<i64: 6>, scalar_prefetch = 0 : i64, scratch_operands = 1 : i64, tpu.core_type = #tpu.core_type<tc>, window_params = [{pipeline_mode = #tpu.pipeline_mode<synchronous>, transform_indices = @transform_0, window_bounds = array<i64: 8, 16>}, {pipeline_mode = #tpu.pipeline_mode<synchronous>, transform_indices = @transform_1, window_bounds = array<i64: 8, 8>}, {transform_indices = @transform_2, window_bounds = array<i64: 1, 16, 32>}, {transform_indices = @transform_3, window_bounds = array<i64: 1, 1, 32>}, {transform_indices = @transform_4, window_bounds = array<i64: 1, 32, 32>}, {transform_indices = @transform_5, window_bounds = array<i64: 1, 1, 32>}, {transform_indices = @transform_6, window_bounds = array<i64: 1, 32, 16>}, {transform_indices = @transform_7, window_bounds = array<i64: 1, 32, 8>}, {pipeline_mode = #tpu.pipeline_mode<synchronous>, transform_indices = @transform_8, window_bounds = array<i64: 8, 16>}, {pipeline_mode = #tpu.pipeline_mode<synchronous>, transform_indices = @transform_9, window_bounds = array<i64: 8, 8>}]} {
    %c0_i32 = arith.constant 0 : i32
    %0 = arith.cmpi eq, %arg0, %c0_i32 : i32
    %1 = arith.extui %0 : i1 to i32
    %c0_i32_0 = arith.constant 0 : i32
    %2 = arith.cmpi ne, %1, %c0_i32_0 : i32
    scf.if %2 {
      %c0_39 = arith.constant 0 : index
      %c0_40 = arith.constant 0 : index
      %39 = vector.load %arg1[%c0_39, %c0_40] : memref<8x16xf32, #tpu.memory_space<vmem>>, vector<8x16xf32>
      %c0_41 = arith.constant 0 : index
      %c0_42 = arith.constant 0 : index
      %40 = vector.load %arg11[%c0_41, %c0_42] : memref<8x16xf32, #tpu.memory_space<vmem>>, vector<8x16xf32>
      tpu.vector_store %arg11[%c0_41, %c0_42], %39 {strides = array<i32>} : memref<8x16xf32, #tpu.memory_space<vmem>>, vector<8x16xf32>,
      %cst_43 = arith.constant 0.000000e+00 : f32
      %41 = vector.broadcast %cst_43 : f32 to vector<8x16xf32>
      %c0_44 = arith.constant 0 : index
      %c0_45 = arith.constant 0 : index
      %42 = vector.load %arg9[%c0_44, %c0_45] : memref<8x16xf32, #tpu.memory_space<vmem>>, vector<8x16xf32>
      tpu.vector_store %arg9[%c0_44, %c0_45], %41 {strides = array<i32>} : memref<8x16xf32, #tpu.memory_space<vmem>>, vector<8x16xf32>,
      %cst_46 = arith.constant 0.000000e+00 : f32
      %43 = vector.broadcast %cst_46 : f32 to vector<8x8xf32>
      %c0_47 = arith.constant 0 : index
      %c0_48 = arith.constant 0 : index
      %44 = vector.load %arg10[%c0_47, %c0_48] : memref<8x8xf32, #tpu.memory_space<vmem>>, vector<8x8xf32>
      tpu.vector_store %arg10[%c0_47, %c0_48], %43 {strides = array<i32>} : memref<8x8xf32, #tpu.memory_space<vmem>>, vector<8x8xf32>,
    } else {
    }
    %c0 = arith.constant 0 : index
    %c0_1 = arith.constant 0 : index
    %3 = vector.load %arg2[%c0, %c0_1] : memref<8x8xf32, #tpu.memory_space<vmem>>, vector<8x8xf32>
    %c0_2 = arith.constant 0 : index
    %c0_3 = arith.constant 0 : index
    %4 = vector.load %arg11[%c0_2, %c0_3] : memref<8x16xf32, #tpu.memory_space<vmem>>, vector<8x16xf32>
    %cst = arith.constant dense<0.000000e+00> : vector<8x16xf32>
    %5 = tpu.matmul %3, %4, %cst {dimension_numbers = #tpu.dot_dimension_numbers<[1], [0], [0], [1], [0, 0, 1, 1], [], []>} : vector<8x8xf32>, vector<8x16xf32>, vector<8x16xf32> -> vector<8x16xf32>
    %c0_4 = arith.constant 0 : index
    %c0_5 = arith.constant 0 : index
    %c0_6 = arith.constant 0 : index
    %6 = vector.load %arg3[%c0_4, %c0_5, %c0_6] : memref<1x16x32xf32, #tpu.memory_space<vmem>>, vector<1x16x32xf32>
    %7 = vector.shape_cast %6 : vector<1x16x32xf32> to vector<16x32xf32>
    %cst_7 = arith.constant dense<0.000000e+00> : vector<8x32xf32>
    %8 = tpu.matmul %5, %7, %cst_7 {dimension_numbers = #tpu.dot_dimension_numbers<[1], [0], [0], [1], [0, 0, 1, 1], [], []>} : vector<8x16xf32>, vector<16x32xf32>, vector<8x32xf32> -> vector<8x32xf32>
    %c0_8 = arith.constant 0 : index
    %c0_9 = arith.constant 0 : index
    %c0_10 = arith.constant 0 : index
    %9 = vector.load %arg4[%c0_8, %c0_9, %c0_10] : memref<1x1x32xf32, #tpu.memory_space<vmem>>, vector<1x1x32xf32>
    %10 = vector.shape_cast %9 : vector<1x1x32xf32> to vector<1x32xf32>
    %11 = vector.broadcast %10 : vector<1x32xf32> to vector<8x32xf32>
    %12 = arith.addf %8, %11 : vector<8x32xf32>
    %cst_11 = arith.constant 0.000000e+00 : f32
    %13 = vector.broadcast %cst_11 : f32 to vector<8x32xf32>
    %14 = arith.maximumf %12, %13 : vector<8x32xf32>
    %cst_12 = arith.constant dense<0.000000e+00> : vector<8x32xf32>
    %15 = tpu.matmul %3, %14, %cst_12 {dimension_numbers = #tpu.dot_dimension_numbers<[1], [0], [0], [1], [0, 0, 1, 1], [], []>} : vector<8x8xf32>, vector<8x32xf32>, vector<8x32xf32> -> vector<8x32xf32>
    %c0_13 = arith.constant 0 : index
    %c0_14 = arith.constant 0 : index
    %c0_15 = arith.constant 0 : index
    %16 = vector.load %arg5[%c0_13, %c0_14, %c0_15] : memref<1x32x32xf32, #tpu.memory_space<vmem>>, vector<1x32x32xf32>
    %17 = vector.shape_cast %16 : vector<1x32x32xf32> to vector<32x32xf32>
    %cst_16 = arith.constant dense<0.000000e+00> : vector<8x32xf32>
    %18 = tpu.matmul %15, %17, %cst_16 {dimension_numbers = #tpu.dot_dimension_numbers<[1], [0], [0], [1], [0, 0, 1, 1], [], []>} : vector<8x32xf32>, vector<32x32xf32>, vector<8x32xf32> -> vector<8x32xf32>
    %c0_17 = arith.constant 0 : index
    %c0_18 = arith.constant 0 : index
    %c0_19 = arith.constant 0 : index
    %19 = vector.load %arg6[%c0_17, %c0_18, %c0_19] : memref<1x1x32xf32, #tpu.memory_space<vmem>>, vector<1x1x32xf32>
    %20 = vector.shape_cast %19 : vector<1x1x32xf32> to vector<1x32xf32>
    %21 = vector.broadcast %20 : vector<1x32xf32> to vector<8x32xf32>
    %22 = arith.addf %18, %21 : vector<8x32xf32>
    %cst_20 = arith.constant 0.000000e+00 : f32
    %23 = vector.broadcast %cst_20 : f32 to vector<8x32xf32>
    %24 = arith.maximumf %22, %23 : vector<8x32xf32>
    %c0_21 = arith.constant 0 : index
    %c0_22 = arith.constant 0 : index
    %c0_23 = arith.constant 0 : index
    %25 = vector.load %arg7[%c0_21, %c0_22, %c0_23] : memref<1x32x16xf32, #tpu.memory_space<vmem>>, vector<1x32x16xf32>
    %26 = vector.shape_cast %25 : vector<1x32x16xf32> to vector<32x16xf32>
    %cst_24 = arith.constant dense<0.000000e+00> : vector<8x16xf32>
    %27 = tpu.matmul %24, %26, %cst_24 {dimension_numbers = #tpu.dot_dimension_numbers<[1], [0], [0], [1], [0, 0, 1, 1], [], []>} : vector<8x32xf32>, vector<32x16xf32>, vector<8x16xf32> -> vector<8x16xf32>
    %c0_25 = arith.constant 0 : index
    %c0_26 = arith.constant 0 : index
    %c0_27 = arith.constant 0 : index
    %28 = vector.load %arg8[%c0_25, %c0_26, %c0_27] : memref<1x32x8xf32, #tpu.memory_space<vmem>>, vector<1x32x8xf32>
    %29 = vector.shape_cast %28 : vector<1x32x8xf32> to vector<32x8xf32>
    %cst_28 = arith.constant dense<0.000000e+00> : vector<8x8xf32>
    %30 = tpu.matmul %24, %29, %cst_28 {dimension_numbers = #tpu.dot_dimension_numbers<[1], [0], [0], [1], [0, 0, 1, 1], [], []>} : vector<8x32xf32>, vector<32x8xf32>, vector<8x8xf32> -> vector<8x8xf32>
    %31 = arith.subf %4, %27 : vector<8x16xf32>
    %c0_29 = arith.constant 0 : index
    %c0_30 = arith.constant 0 : index
    %32 = vector.load %arg11[%c0_29, %c0_30] : memref<8x16xf32, #tpu.memory_space<vmem>>, vector<8x16xf32>
    tpu.vector_store %arg11[%c0_29, %c0_30], %31 {strides = array<i32>} : memref<8x16xf32, #tpu.memory_space<vmem>>, vector<8x16xf32>,
    %c0_31 = arith.constant 0 : index
    %c0_32 = arith.constant 0 : index
    %33 = vector.load %arg9[%c0_31, %c0_32] : memref<8x16xf32, #tpu.memory_space<vmem>>, vector<8x16xf32>
    %34 = arith.addf %33, %27 : vector<8x16xf32>
    %c0_33 = arith.constant 0 : index
    %c0_34 = arith.constant 0 : index
    %35 = vector.load %arg9[%c0_33, %c0_34] : memref<8x16xf32, #tpu.memory_space<vmem>>, vector<8x16xf32>
    tpu.vector_store %arg9[%c0_33, %c0_34], %34 {strides = array<i32>} : memref<8x16xf32, #tpu.memory_space<vmem>>, vector<8x16xf32>,
    %c0_35 = arith.constant 0 : index
    %c0_36 = arith.constant 0 : index
    %36 = vector.load %arg10[%c0_35, %c0_36] : memref<8x8xf32, #tpu.memory_space<vmem>>, vector<8x8xf32>
    %37 = arith.addf %36, %30 : vector<8x8xf32>
    %c0_37 = arith.constant 0 : index
    %c0_38 = arith.constant 0 : index
    %38 = vector.load %arg10[%c0_37, %c0_38] : memref<8x8xf32, #tpu.memory_space<vmem>>, vector<8x8xf32>
    tpu.vector_store %arg10[%c0_37, %c0_38], %37 {strides = array<i32>} : memref<8x8xf32, #tpu.memory_space<vmem>>, vector<8x8xf32>,
    return
  }
  func.func @transform_0(%arg0: i32) -> (i32, i32) {
    %c0_i32 = arith.constant 0 : i32
    %c0_i32_0 = arith.constant 0 : i32
    %c0_i32_1 = arith.constant 0 : i32
    return %c0_i32, %c0_i32_0 : i32, i32
  }
  func.func @transform_1(%arg0: i32) -> (i32, i32) {
    %c0_i32 = arith.constant 0 : i32
    %c0_i32_0 = arith.constant 0 : i32
    %c0_i32_1 = arith.constant 0 : i32
    return %c0_i32, %c0_i32_0 : i32, i32
  }
  func.func @transform_2(%arg0: i32) -> (i32, i32, i32) {
    %c0_i32 = arith.constant 0 : i32
    %c0_i32_0 = arith.constant 0 : i32
    %c0_i32_1 = arith.constant 0 : i32
    return %arg0, %c0_i32, %c0_i32_0 : i32, i32, i32
  }
  func.func @transform_3(%arg0: i32) -> (i32, i32, i32) {
    %c0_i32 = arith.constant 0 : i32
    %c0_i32_0 = arith.constant 0 : i32
    %c0_i32_1 = arith.constant 0 : i32
    return %arg0, %c0_i32, %c0_i32_0 : i32, i32, i32
  }
  func.func @transform_4(%arg0: i32) -> (i32, i32, i32) {
    %c0_i32 = arith.constant 0 : i32
    %c0_i32_0 = arith.constant 0 : i32
    %c0_i32_1 = arith.constant 0 : i32
    return %arg0, %c0_i32, %c0_i32_0 : i32, i32, i32
  }
  func.func @transform_5(%arg0: i32) -> (i32, i32, i32) {
    %c0_i32 = arith.constant 0 : i32
    %c0_i32_0 = arith.constant 0 : i32
    %c0_i32_1 = arith.constant 0 : i32
    return %arg0, %c0_i32, %c0_i32_0 : i32, i32, i32
  }
  func.func @transform_6(%arg0: i32) -> (i32, i32, i32) {
    %c0_i32 = arith.constant 0 : i32
    %c0_i32_0 = arith.constant 0 : i32
    %c0_i32_1 = arith.constant 0 : i32
    return %arg0, %c0_i32, %c0_i32_0 : i32, i32, i32
  }
  func.func @transform_7(%arg0: i32) -> (i32, i32, i32) {
    %c0_i32 = arith.constant 0 : i32
    %c0_i32_0 = arith.constant 0 : i32
    %c0_i32_1 = arith.constant 0 : i32
    return %arg0, %c0_i32, %c0_i32_0 : i32, i32, i32
  }
  func.func @transform_8(%arg0: i32) -> (i32, i32) {
    %c0_i32 = arith.constant 0 : i32
    %c0_i32_0 = arith.constant 0 : i32
    %c0_i32_1 = arith.constant 0 : i32
    return %c0_i32, %c0_i32_0 : i32, i32
  }
  func.func @transform_9(%arg0: i32) -> (i32, i32) {
    %c0_i32 = arith.constant 0 : i32
    %c0_i32_0 = arith.constant 0 : i32
    %c0_i32_1 = arith.constant 0 : i32
    return %c0_i32, %c0_i32_0 : i32, i32
  }
}

</mosaic_0001>

<llo_original>
// kernel: n_model_forward.1
$region0: #{n_model_forward.1}
  #allocation0 [shape = 'u32[]', space=smem, size = 0x4, offset = 0x4, fixed_abs, tag = 'smem constant byte address 0x4 - core index']
  #allocation1 [shape = 'u32[144,128]{1,0:T(1,128)}', space=vmem, size = 0x12000, scoped, tag = 'internal scratch']
  #allocation2 [shape = 'f32[8,16]{1,0:T(8,128)}', space=vmem, size = 0x1000, scoped, tag = 'scratch operand']
  %s0 = inlined_call_operand.vmem [shape: f32[8,16], index: 0, kind: input, shape index: {}]
  %s1 = inlined_call_operand.vmem [shape: f32[8,8], index: 1, kind: input, shape index: {}]
  %s2 = inlined_call_operand.vmem [shape: f32[6,16,32], index: 2, kind: input, shape index: {}]
  %s3 = inlined_call_operand.vmem [shape: f32[6,1,32], index: 3, kind: input, shape index: {}]
  %s4 = inlined_call_operand.vmem [shape: f32[6,32,32], index: 4, kind: input, shape index: {}]
  %s5 = inlined_call_operand.vmem [shape: f32[6,1,32], index: 5, kind: input, shape index: {}]
  %s6 = inlined_call_operand.vmem [shape: f32[6,32,16], index: 6, kind: input, shape index: {}]
  %s7 = inlined_call_operand.vmem [shape: f32[6,32,8], index: 7, kind: input, shape index: {}]
  %s8 = inlined_call_operand.hbm [shape: f32[8,16], index: 8, kind: output, shape index: {0}]
  %s9 = inlined_call_operand.hbm [shape: f32[8,8], index: 9, kind: output, shape index: {1}]
  %10 = xla_tuple %s8, %s9
  %s11 = sld [smem:[#allocation0]]
  $region77: #{n_model_forward.1} parent=0
    _
  %s13 = ssub.s32 1, %s11
  %s14 = scalar_select 0, %s13, %s11
  $region1: #{n_model_forward.1} parent=0
    #allocation3 [shape = 'u8[4096]{0}', space=vmem, size = 0x1000, scoped, tag = 'output window, operand 0, single buffered']
    #allocation4 [shape = 's32[2]{0}', space=sflag, size = 0x8, scoped, tag = 'scoped memory for n_model_forward.1']
    #allocation5 [shape = 'u8[4096]{0}', space=vmem, size = 0x1000, scoped, tag = 'output window, operand 1, single buffered']
    #allocation6 [shape = 's32[1]{0}', space=sflag, size = 0x4, scoped, tag = 'scoped memory for n_model_forward.1']
    %15 = vsyncpa [#allocation4], 0
    %16 = vsyncpa [#allocation6], 0
    loop: start=0, step=1, limit=8
    $region2: #{n_model_forward.1} parent=1 // loop_pre_header
      _
    $region3: #{n_model_forward.1} parent=1 // loop_header
      %s18 = sphi 0, %s22
      %p19 = scmp.ge.s32.totalorder %s18, 8
      %s26 = sphi 0, %s26
      %s28 = sphi 0, %s26
      %s29 = sphi 0, %s28
      %s43 = sphi 0, %s29
      %s47 = sphi 0, %s47
      %s49 = sphi 0, %s47
      %s50 = sphi 0, %s49
      %s64 = sphi 0, %s50
      %s70 = sphi 0, %s72
      %s73 = sphi 0, %s70
      %s74 = sphi 0, %s73
      %s90 = sphi 0, %s74
      %s96 = sphi 0, %s98
      %s99 = sphi 0, %s96
      %s100 = sphi 0, %s99
      %s116 = sphi 0, %s100
      %s122 = sphi 0, %s124
      %s125 = sphi 0, %s122
      %s126 = sphi 0, %s125
      %s142 = sphi 0, %s126
      %s148 = sphi 0, %s150
      %s151 = sphi 0, %s148
      %s152 = sphi 0, %s151
      %s168 = sphi 0, %s152
      %s174 = sphi 0, %s176
      %s177 = sphi 0, %s174
      %s178 = sphi 0, %s177
      %s194 = sphi 0, %s178
      %s200 = sphi 0, %s202
      %s203 = sphi 0, %s200
      %s204 = sphi 0, %s203
      %s220 = sphi 0, %s204
      %s224 = sphi 0, %s224
      %s226 = sphi 0, %s224
      %s227 = sphi 0, %s226
      %s241 = sphi 0, %s227
      %s245 = sphi 0, %s245
      %s247 = sphi 0, %s245
      %s248 = sphi 0, %s247
      %s262 = sphi 0, %s248
    $region4: #{n_model_forward.1} parent=1 // loop_header_branch
      %21 = sbr.rel (%p19) target = $region8
    $region5: #{n_model_forward.1} parent=1 // loop_body
      %s23 = ssub.s32 %s18, 1
      %s24 = ssub.s32 %s18, 2
      %s25 = sadd.s32 %s18, 1
      %s27 = sadd.s32 %s26, 1
      %p30 = scmp.eq.s32.totalorder %s18, 5
      %p31 = scmp.ne.s32.totalorder %s26, %s28
      %p32 = scmp.eq.s32.totalorder %s18, 0
      %p33 = por %p31, %p32
      %p34 = scmp.ne.s32.totalorder %s26, %s28
      %p35 = scmp.eq.s32.totalorder %s23, 5
      %p36 = por %p34, %p35
      %p37 = scmp.ne.s32.totalorder %s28, %s29
      %p38 = scmp.eq.s32.totalorder %s23, 0
      %p39 = por %p37, %p38
      %p40 = scmp.ne.s32.totalorder %s28, %s29
      %p41 = scmp.eq.s32.totalorder %s24, 5
      %p42 = por %p40, %p41
      %p44 = scmp.ne.s32.totalorder %s29, %s43
      %p45 = scmp.eq.s32.totalorder %s24, 0
      %p46 = por %p44, %p45
      %s48 = sadd.s32 %s47, 1
      %p51 = scmp.eq.s32.totalorder %s18, 5
      %p52 = scmp.ne.s32.totalorder %s47, %s49
      %p53 = scmp.eq.s32.totalorder %s18, 0
      %p54 = por %p52, %p53
      %p55 = scmp.ne.s32.totalorder %s47, %s49
      %p56 = scmp.eq.s32.totalorder %s23, 5
      %p57 = por %p55, %p56
      %p58 = scmp.ne.s32.totalorder %s49, %s50
      %p59 = scmp.eq.s32.totalorder %s23, 0
      %p60 = por %p58, %p59
      %p61 = scmp.ne.s32.totalorder %s49, %s50
      %p62 = scmp.eq.s32.totalorder %s24, 5
      %p63 = por %p61, %p62
      %p65 = scmp.ne.s32.totalorder %s50, %s64
      %p66 = scmp.eq.s32.totalorder %s24, 0
      %p67 = por %p65, %p66
      %s68 = ssub.s32 %s18, %s25
      %p69 = scmp.eq.s32.totalorder %s68, 0
      %s71 = sadd.s32 %s70, 1
      %s72 = scalar_select %p69, %s70, %s71
      %p75 = pneg %p69
      %p76 = scmp.eq.s32.totalorder %s18, 5
      %p77 = por %p75, %p76
      %p78 = scmp.ne.s32.totalorder %s70, %s73
      %p79 = scmp.eq.s32.totalorder %s18, 0
      %p80 = por %p78, %p79
      %p81 = scmp.ne.s32.totalorder %s70, %s73
      %p82 = scmp.eq.s32.totalorder %s23, 5
      %p83 = por %p81, %p82
      %p84 = scmp.ne.s32.totalorder %s73, %s74
      %p85 = scmp.eq.s32.totalorder %s23, 0
      %p86 = por %p84, %p85
      %p87 = scmp.ne.s32.totalorder %s73, %s74
      %p88 = scmp.eq.s32.totalorder %s24, 5
      %p89 = por %p87, %p88
      %p91 = scmp.ne.s32.totalorder %s74, %s90
      %p92 = scmp.eq.s32.totalorder %s24, 0
      %p93 = por %p91, %p92
      %s94 = ssub.s32 %s18, %s25
      %p95 = scmp.eq.s32.totalorder %s94, 0
      %s97 = sadd.s32 %s96, 1
      %s98 = scalar_select %p95, %s96, %s97
      %p101 = pneg %p95
      %p102 = scmp.eq.s32.totalorder %s18, 5
      %p103 = por %p101, %p102
      %p104 = scmp.ne.s32.totalorder %s96, %s99
      %p105 = scmp.eq.s32.totalorder %s18, 0
      %p106 = por %p104, %p105
      %p107 = scmp.ne.s32.totalorder %s96, %s99
      %p108 = scmp.eq.s32.totalorder %s23, 5
      %p109 = por %p107, %p108
      %p110 = scmp.ne.s32.totalorder %s99, %s100
      %p111 = scmp.eq.s32.totalorder %s23, 0
      %p112 = por %p110, %p111
      %p113 = scmp.ne.s32.totalorder %s99, %s100
      %p114 = scmp.eq.s32.totalorder %s24, 5
      %p115 = por %p113, %p114
      %p117 = scmp.ne.s32.totalorder %s100, %s116
      %p118 = scmp.eq.s32.totalorder %s24, 0
      %p119 = por %p117, %p118
      %s120 = ssub.s32 %s18, %s25
      %p121 = scmp.eq.s32.totalorder %s120, 0
      %s123 = sadd.s32 %s122, 1
      %s124 = scalar_select %p121, %s122, %s123
      %p127 = pneg %p121
      %p128 = scmp.eq.s32.totalorder %s18, 5
      %p129 = por %p127, %p128
      %p130 = scmp.ne.s32.totalorder %s122, %s125
      %p131 = scmp.eq.s32.totalorder %s18, 0
      %p132 = por %p130, %p131
      %p133 = scmp.ne.s32.totalorder %s122, %s125
      %p134 = scmp.eq.s32.totalorder %s23, 5
      %p135 = por %p133, %p134
      %p136 = scmp.ne.s32.totalorder %s125, %s126
      %p137 = scmp.eq.s32.totalorder %s23, 0
      %p138 = por %p136, %p137
      %p139 = scmp.ne.s32.totalorder %s125, %s126
      %p140 = scmp.eq.s32.totalorder %s24, 5
      %p141 = por %p139, %p140
      %p143 = scmp.ne.s32.totalorder %s126, %s142
      %p144 = scmp.eq.s32.totalorder %s24, 0
      %p145 = por %p143, %p144
      %s146 = ssub.s32 %s18, %s25
      %p147 = scmp.eq.s32.totalorder %s146, 0
      %s149 = sadd.s32 %s148, 1
      %s150 = scalar_select %p147, %s148, %s149
      %p153 = pneg %p147
      %p154 = scmp.eq.s32.totalorder %s18, 5
      %p155 = por %p153, %p154
      %p156 = scmp.ne.s32.totalorder %s148, %s151
      %p157 = scmp.eq.s32.totalorder %s18, 0
      %p158 = por %p156, %p157
      %p159 = scmp.ne.s32.totalorder %s148, %s151
      %p160 = scmp.eq.s32.totalorder %s23, 5
      %p161 = por %p159, %p160
      %p162 = scmp.ne.s32.totalorder %s151, %s152
      %p163 = scmp.eq.s32.totalorder %s23, 0
      %p164 = por %p162, %p163
      %p165 = scmp.ne.s32.totalorder %s151, %s152
      %p166 = scmp.eq.s32.totalorder %s24, 5
      %p167 = por %p165, %p166
      %p169 = scmp.ne.s32.totalorder %s152, %s168
      %p170 = scmp.eq.s32.totalorder %s24, 0
      %p171 = por %p169, %p170
      %s172 = ssub.s32 %s18, %s25
      %p173 = scmp.eq.s32.totalorder %s172, 0
      %s175 = sadd.s32 %s174, 1
      %s176 = scalar_select %p173, %s174, %s175
      %p179 = pneg %p173
      %p180 = scmp.eq.s32.totalorder %s18, 5
      %p181 = por %p179, %p180
      %p182 = scmp.ne.s32.totalorder %s174, %s177
      %p183 = scmp.eq.s32.totalorder %s18, 0
      %p184 = por %p182, %p183
      %p185 = scmp.ne.s32.totalorder %s174, %s177
      %p186 = scmp.eq.s32.totalorder %s23, 5
      %p187 = por %p185, %p186
      %p188 = scmp.ne.s32.totalorder %s177, %s178
      %p189 = scmp.eq.s32.totalorder %s23, 0
      %p190 = por %p188, %p189
      %p191 = scmp.ne.s32.totalorder %s177, %s178
      %p192 = scmp.eq.s32.totalorder %s24, 5
      %p193 = por %p191, %p192
      %p195 = scmp.ne.s32.totalorder %s178, %s194
      %p196 = scmp.eq.s32.totalorder %s24, 0
      %p197 = por %p195, %p196
      %s198 = ssub.s32 %s18, %s25
      %p199 = scmp.eq.s32.totalorder %s198, 0
      %s201 = sadd.s32 %s200, 1
      %s202 = scalar_select %p199, %s200, %s201
      %p205 = pneg %p199
      %p206 = scmp.eq.s32.totalorder %s18, 5
      %p207 = por %p205, %p206
      %p208 = scmp.ne.s32.totalorder %s200, %s203
      %p209 = scmp.eq.s32.totalorder %s18, 0
      %p210 = por %p208, %p209
      %p211 = scmp.ne.s32.totalorder %s200, %s203
      %p212 = scmp.eq.s32.totalorder %s23, 5
      %p213 = por %p211, %p212
      %p214 = scmp.ne.s32.totalorder %s203, %s204
      %p215 = scmp.eq.s32.totalorder %s23, 0
      %p216 = por %p214, %p215
      %p217 = scmp.ne.s32.totalorder %s203, %s204
      %p218 = scmp.eq.s32.totalorder %s24, 5
      %p219 = por %p217, %p218
      %p221 = scmp.ne.s32.totalorder %s204, %s220
      %p222 = scmp.eq.s32.totalorder %s24, 0
      %p223 = por %p221, %p222
      %s225 = sadd.s32 %s224, 1
      %p228 = scmp.eq.s32.totalorder %s18, 5
      %p229 = scmp.ne.s32.totalorder %s224, %s226
      %p230 = scmp.eq.s32.totalorder %s18, 0
      %p231 = por %p229, %p230
      %p232 = scmp.ne.s32.totalorder %s224, %s226
      %p233 = scmp.eq.s32.totalorder %s23, 5
      %p234 = por %p232, %p233
      %p235 = scmp.ne.s32.totalorder %s226, %s227
      %p236 = scmp.eq.s32.totalorder %s23, 0
      %p237 = por %p235, %p236
      %p238 = scmp.ne.s32.totalorder %s226, %s227
      %p239 = scmp.eq.s32.totalorder %s24, 5
      %p240 = por %p238, %p239
      %p242 = scmp.ne.s32.totalorder %s227, %s241
      %p243 = scmp.eq.s32.totalorder %s24, 0
      %p244 = por %p242, %p243
      %s246 = sadd.s32 %s245, 1
      %p249 = scmp.eq.s32.totalorder %s18, 5
      %p250 = scmp.ne.s32.totalorder %s245, %s247
      %p251 = scmp.eq.s32.totalorder %s18, 0
      %p252 = por %p250, %p251
      %p253 = scmp.ne.s32.totalorder %s245, %s247
      %p254 = scmp.eq.s32.totalorder %s23, 5
      %p255 = por %p253, %p254
      %p256 = scmp.ne.s32.totalorder %s247, %s248
      %p257 = scmp.eq.s32.totalorder %s23, 0
      %p258 = por %p256, %p257
      %p259 = scmp.ne.s32.totalorder %s247, %s248
      %p260 = scmp.eq.s32.totalorder %s24, 5
      %p261 = por %p259, %p260
      %p263 = scmp.ne.s32.totalorder %s248, %s262
      %p264 = scmp.eq.s32.totalorder %s24, 0
      %p265 = por %p263, %p264
      %p266 = scmp.le.s32.totalorder 1, %s18
      %p267 = scmp.lt.s32.totalorder %s18, 7
      %p268 = pnand %p266, %p267
      %p269 = pneg %p268
      // Predicated region
      $region9: #{n_model_forward.1} parent=5 // pred_check
        _
      $region10: #{n_model_forward.1} parent=5 // pred_check_branch
        %271 = sbr.rel (%p268) target = $region12
      $region11: #{n_model_forward.1} parent=5 // pred_region
        %s272 = ssub.s32 %s18, 1
        // Predicated region
        $region13: #{n_model_forward.1} parent=11 // pred_check
          %p273 = pneg %p39
        $region14: #{n_model_forward.1} parent=11 // pred_check_branch
          %275 = sbr.rel (%p273) target = $region16
        $region15: #{n_model_forward.1} parent=11 // pred_region
          _
        $region16: #{n_model_forward.1} parent=11 // pred_fallthru
          _
        // Predicated region
        $region17: #{n_model_forward.1} parent=11 // pred_check
          %p276 = pneg %p60
        $region18: #{n_model_forward.1} parent=11 // pred_check_branch
          %278 = sbr.rel (%p276) target = $region20
        $region19: #{n_model_forward.1} parent=11 // pred_region
          _
        $region20: #{n_model_forward.1} parent=11 // pred_fallthru
          _
      $region12: #{n_model_forward.1} parent=5 // pred_fallthru
        _
      %p279 = scmp.lt.s32.totalorder %s18, 6
      // Predicated region
      $region21: #{n_model_forward.1} parent=5 // pred_check
        %p280 = pneg %p279
      $region22: #{n_model_forward.1} parent=5 // pred_check_branch
        %282 = sbr.rel (%p280) target = $region24
      $region23: #{n_model_forward.1} parent=5 // pred_region
        // Predicated region
        $region25: #{n_model_forward.1} parent=23 // pred_check
          %p283 = pneg %p80
        $region26: #{n_model_forward.1} parent=23 // pred_check_branch
          %285 = sbr.rel (%p283) target = $region28
        $region27: #{n_model_forward.1} parent=23 // pred_region
          %p286 = scmp.lt.s32.totalorder %s18, 5
          %s287 = scalar_select %p286, %s18, 5
          %s288 = smul.addr %s287, 2
          %s289 = smul.addr %s288, 8
          %s290 = scalar_lea.vmem %s2, %s289
        $region28: #{n_model_forward.1} parent=23 // pred_fallthru
          _
        // Predicated region
        $region29: #{n_model_forward.1} parent=23 // pred_check
          %p291 = pneg %p106
        $region30: #{n_model_forward.1} parent=23 // pred_check_branch
          %293 = sbr.rel (%p291) target = $region32
        $region31: #{n_model_forward.1} parent=23 // pred_region
          %p294 = scmp.lt.s32.totalorder %s18, 5
          %s295 = scalar_select %p294, %s18, 5
          %s296 = scalar_lea.vmem %s3, %s295
        $region32: #{n_model_forward.1} parent=23 // pred_fallthru
          _
        // Predicated region
        $region33: #{n_model_forward.1} parent=23 // pred_check
          %p297 = pneg %p132
        $region34: #{n_model_forward.1} parent=23 // pred_check_branch
          %299 = sbr.rel (%p297) target = $region36
        $region35: #{n_model_forward.1} parent=23 // pred_region
          %p300 = scmp.lt.s32.totalorder %s18, 5
          %s301 = scalar_select %p300, %s18, 5
          %s302 = smul.addr %s301, 4
          %s303 = smul.addr %s302, 8
          %s304 = scalar_lea.vmem %s4, %s303
        $region36: #{n_model_forward.1} parent=23 // pred_fallthru
          _
        // Predicated region
        $region37: #{n_model_forward.1} parent=23 // pred_check
          %p305 = pneg %p158
        $region38: #{n_model_forward.1} parent=23 // pred_check_branch
          %307 = sbr.rel (%p305) target = $region40
        $region39: #{n_model_forward.1} parent=23 // pred_region
          %p308 = scmp.lt.s32.totalorder %s18, 5
          %s309 = scalar_select %p308, %s18, 5
          %s310 = scalar_lea.vmem %s5, %s309
        $region40: #{n_model_forward.1} parent=23 // pred_fallthru
          _
        // Predicated region
        $region41: #{n_model_forward.1} parent=23 // pred_check
          %p311 = pneg %p184
        $region42: #{n_model_forward.1} parent=23 // pred_check_branch
          %313 = sbr.rel (%p311) target = $region44
        $region43: #{n_model_forward.1} parent=23 // pred_region
          %p314 = scmp.lt.s32.totalorder %s18, 5
          %s315 = scalar_select %p314, %s18, 5
          %s316 = smul.addr %s315, 4
          %s317 = smul.addr %s316, 8
          %s318 = scalar_lea.vmem %s6, %s317
        $region44: #{n_model_forward.1} parent=23 // pred_fallthru
          _
        // Predicated region
        $region45: #{n_model_forward.1} parent=23 // pred_check
          %p319 = pneg %p210
        $region46: #{n_model_forward.1} parent=23 // pred_check_branch
          %321 = sbr.rel (%p319) target = $region48
        $region47: #{n_model_forward.1} parent=23 // pred_region
          %p322 = scmp.lt.s32.totalorder %s18, 5
          %s323 = scalar_select %p322, %s18, 5
          %s324 = smul.addr %s323, 4
          %s325 = smul.addr %s324, 8
          %s326 = scalar_lea.vmem %s7, %s325
        $region48: #{n_model_forward.1} parent=23 // pred_fallthru
          _
      $region24: #{n_model_forward.1} parent=5 // pred_fallthru
        _
      %p327 = scmp.le.s32.totalorder 1, %s18
      %p328 = scmp.lt.s32.totalorder %s18, 7
      %p329 = pnand %p327, %p328
      %p330 = pneg %p329
      // Predicated region
      $region49: #{n_model_forward.1} parent=5 // pred_check
        _
      $region50: #{n_model_forward.1} parent=5 // pred_check_branch
        %332 = sbr.rel (%p329) target = $region52
      $region51: #{n_model_forward.1} parent=5 // pred_region
        %s333 = ssub.s32 %s18, 1
        %p334 = pneg %p39
        %p335 = pneg %p36
        %p336 = pneg %p60
        %p337 = pneg %p57
        %p338 = scmp.lt.s32.totalorder %s23, 5
        %s339 = scalar_select %p338, %s23, 5
        %s340 = smul.addr %s339, 2
        %s341 = smul.addr %s340, 8
        %s342 = scalar_lea.vmem %s2, %s341
        %p343 = pneg %p86
        %p344 = pneg %p83
        %p345 = scmp.lt.s32.totalorder %s23, 5
        %s346 = scalar_select %p345, %s23, 5
        %s347 = scalar_lea.vmem %s3, %s346
        %p348 = pneg %p112
        %p349 = pneg %p109
        %p350 = scmp.lt.s32.totalorder %s23, 5
        %s351 = scalar_select %p350, %s23, 5
        %s352 = smul.addr %s351, 4
        %s353 = smul.addr %s352, 8
        %s354 = scalar_lea.vmem %s4, %s353
        %p355 = pneg %p138
        %p356 = pneg %p135
        %p357 = scmp.lt.s32.totalorder %s23, 5
        %s358 = scalar_select %p357, %s23, 5
        %s359 = scalar_lea.vmem %s5, %s358
        %p360 = pneg %p164
        %p361 = pneg %p161
        %p362 = scmp.lt.s32.totalorder %s23, 5
        %s363 = scalar_select %p362, %s23, 5
        %s364 = smul.addr %s363, 4
        %s365 = smul.addr %s364, 8
        %s366 = scalar_lea.vmem %s6, %s365
        %p367 = pneg %p190
        %p368 = pneg %p187
        %p369 = scmp.lt.s32.totalorder %s23, 5
        %s370 = scalar_select %p369, %s23, 5
        %s371 = smul.addr %s370, 4
        %s372 = smul.addr %s371, 8
        %s373 = scalar_lea.vmem %s7, %s372
        %p374 = pneg %p216
        %p375 = pneg %p213
        %p376 = pneg %p237
        %p377 = pneg %p234
        %p378 = pneg %p258
        %p379 = pneg %p255
        %p380 = scmp.lt.s32.totalorder %s23, 5
        %s381 = scalar_select %p380, %s23, 5
        %s382 = smul.addr %s381, 2
        %s383 = smul.addr %s382, 8
        %s384 = scalar_lea.vmem %s2, %s383
        %p385 = scmp.lt.s32.totalorder %s23, 5
        %s386 = scalar_select %p385, %s23, 5
        %s387 = scalar_lea.vmem %s3, %s386
        %p388 = scmp.lt.s32.totalorder %s23, 5
        %s389 = scalar_select %p388, %s23, 5
        %s390 = smul.addr %s389, 4
        %s391 = smul.addr %s390, 8
        %s392 = scalar_lea.vmem %s4, %s391
        %p393 = scmp.lt.s32.totalorder %s23, 5
        %s394 = scalar_select %p393, %s23, 5
        %s395 = scalar_lea.vmem %s5, %s394
        %p396 = scmp.lt.s32.totalorder %s23, 5
        %s397 = scalar_select %p396, %s23, 5
        %s398 = smul.addr %s397, 4
        %s399 = smul.addr %s398, 8
        %s400 = scalar_lea.vmem %s6, %s399
        %p401 = scmp.lt.s32.totalorder %s23, 5
        %s402 = scalar_select %p401, %s23, 5
        %s403 = smul.addr %s402, 4
        %s404 = smul.addr %s403, 8
        %s405 = scalar_lea.vmem %s7, %s404
        %p406 = scmp.eq.s32.totalorder %s23, 0
        // Predicated region
        $region53: #{n_model_forward.1} parent=51 // pred_check
          %p407 = pneg %p406
        $region54: #{n_model_forward.1} parent=51 // pred_check_branch
          %409 = sbr.rel (%p407) target = $region56
        $region55: #{n_model_forward.1} parent=51 // pred_region
          %v410 = vld [vmem:[%s0] sm:$0xff]
          %vm411 = vcmask 130048
          %412 = vst.msk [vmem:[#allocation2] sm:$0xff] %vm411, %v410
          %413 = vst.msk [vmem:[#allocation3] sm:$0xff] %vm411, 0.0
          %vm414 = vcmask 64512
          %415 = vst.msk [vmem:[#allocation5] sm:$0xff] %vm414, 0.0
        $region56: #{n_model_forward.1} parent=51 // pred_fallthru
          _
        %v416 = vld [vmem:[%s1] sm:$0xff]
        %v417 = vld [vmem:[#allocation2] sm:$0xff]
        %vm418 = vcmask 64512
        %v420 = vsel %vm418, %v416, 0
        %422 = vmatprep.subr.mxu0 0.0
        %423 = vmatpush1.msra.mxu0 %v417
        %424 = vmatprep.subr.mxu0 0.0
        %425 = vmatpush1.msra.mxu0 0.0
        %426 = vmatprep.subr.mxu0 0.0
        %427 = vmatpush1.msra.mxu0 0.0
        %428 = vmatprep.subr.mxu0 0.0
        %429 = vmatpush1.msra.mxu0 0.0
        %430 = vmatprep.subr.mxu0 0.0
        %431 = vmatpush1.msra.mxu0 0.0
        %432 = vmatprep.subr.mxu0 0.0
        %433 = vmatpush1.msra.mxu0 0.0
        %434 = vmatprep.subr.mxu0 0.0
        %435 = vmatpush1.msra.mxu0 0.0
        %436 = vmatprep.subr.mxu0 0.0
        %437 = vmatpush1.msra.mxu0 0.0
        %438 = vmatprep.subr.mxu0 0.0
        %439 = vmatpush1.msra.mxu0 0.0
        %440 = vmatprep.subr.mxu0 0.0
        %441 = vmatpush1.msra.mxu0 0.0
        %442 = vmatprep.subr.mxu0 0.0
        %443 = vmatpush1.msra.mxu0 0.0
        %444 = vmatprep.subr.mxu0 0.0
        %445 = vmatpush1.msra.mxu0 0.0
        %446 = vmatprep.subr.mxu0 0.0
        %447 = vmatpush1.msra.mxu0 0.0
        %448 = vmatprep.subr.mxu0 0.0
        %449 = vmatpush1.msra.mxu0 0.0
        %450 = vmatprep.subr.mxu0 0.0
        %451 = vmatpush1.msra.mxu0 0.0
        %452 = vmatprep.subr.mxu0 0.0
        %453 = vmatpush1.msra.mxu0 0.0
        %454 = vmatprep.subr.mxu0 0.0
        %455 = vmatpush1.msra.mxu0 0.0
        %456 = vmatprep.subr.mxu0 0.0
        %457 = vmatpush1.msra.mxu0 0.0
        %458 = vmatprep.subr.mxu0 0.0
        %459 = vmatpush1.msra.mxu0 0.0
        %460 = vmatprep.subr.mxu0 0.0
        %461 = vmatpush1.msra.mxu0 0.0
        %462 = vmatprep.subr.mxu0 0.0
        %463 = vmatpush1.msra.mxu0 0.0
        %464 = vmatprep.subr.mxu0 0.0
        %465 = vmatpush1.msra.mxu0 0.0
        %466 = vmatprep.subr.mxu0 0.0
        %467 = vmatpush1.msra.mxu0 0.0
        %468 = vmatprep.subr.mxu0 0.0
        %469 = vmatpush1.msra.mxu0 0.0
        %470 = vmatprep.subr.mxu0 0.0
        %471 = vmatpush1.msra.mxu0 0.0
        %472 = vmatprep.subr.mxu0 0.0
        %473 = vmatpush1.msra.mxu0 0.0
        %474 = vmatprep.subr.mxu0 0.0
        %475 = vmatpush1.msra.mxu0 0.0
        %476 = vmatprep.subr.mxu0 0.0
        %477 = vmatpush1.msra.mxu0 0.0
        %478 = vmatprep.subr.mxu0 0.0
        %479 = vmatpush1.msra.mxu0 0.0
        %480 = vmatprep.subr.mxu0 0.0
        %481 = vmatpush1.msra.mxu0 0.0
        %482 = vmatprep.subr.mxu0 0.0
        %483 = vmatpush1.msra.mxu0 0.0
        %484 = vmatprep.subr.mxu0 0.0
        %485 = vmatpush1.msra.mxu0 0.0
        %486 = vmatprep.mubr.f32.mxu0 0.0
        %487 = vmatmul.mubr.f32.gmra.mrb[0].mxu0 %v420
        %v488 = vpop.f32.mrb[0].mxu0
        %v489 = vadd.f32 0.0, %v488
        %v490 = vpop.f32.mrb[0].mxu0
        %491 = vdwg.mxu0
        %v492 = vld [vmem:[%s384] sm:$0xff]
        %v493 = vld [vmem:[%s384 + $0x8] sm:$0xff]
        %v494 = vld [vmem:[%s387] sm:$0x1]
        %v496 = vlaneseq
        %v497 = vshrl.u32 %v496, 7
        %v498 = vsub.s32 0, %v497
        %v499 = vrot.slane %v494, %v498
        %vm501 = vcmask 130048
        %v503 = vsel %vm501, %v489, 0
        %505 = vmatprep.subr.mxu0 0.0
        %506 = vmatpush1.msra.mxu0 %v492
        %507 = vmatprep.subr.mxu0 0.0
        %508 = vmatpush1.msra.mxu0 %v493
        %509 = vmatprep.subr.mxu0 0.0
        %510 = vmatpush1.msra.mxu0 0.0
        %511 = vmatprep.subr.mxu0 0.0
        %512 = vmatpush1.msra.mxu0 0.0
        %513 = vmatprep.subr.mxu0 0.0
        %514 = vmatpush1.msra.mxu0 0.0
        %515 = vmatprep.subr.mxu0 0.0
        %516 = vmatpush1.msra.mxu0 0.0
        %517 = vmatprep.subr.mxu0 0.0
        %518 = vmatpush1.msra.mxu0 0.0
        %519 = vmatprep.subr.mxu0 0.0
        %520 = vmatpush1.msra.mxu0 0.0
        %521 = vmatprep.subr.mxu0 0.0
        %522 = vmatpush1.msra.mxu0 0.0
        %523 = vmatprep.subr.mxu0 0.0
        %524 = vmatpush1.msra.mxu0 0.0
        %525 = vmatprep.subr.mxu0 0.0
        %526 = vmatpush1.msra.mxu0 0.0
        %527 = vmatprep.subr.mxu0 0.0
        %528 = vmatpush1.msra.mxu0 0.0
        %529 = vmatprep.subr.mxu0 0.0
        %530 = vmatpush1.msra.mxu0 0.0
        %531 = vmatprep.subr.mxu0 0.0
        %532 = vmatpush1.msra.mxu0 0.0
        %533 = vmatprep.subr.mxu0 0.0
        %534 = vmatpush1.msra.mxu0 0.0
        %535 = vmatprep.subr.mxu0 0.0
        %536 = vmatpush1.msra.mxu0 0.0
        %537 = vmatprep.subr.mxu0 0.0
        %538 = vmatpush1.msra.mxu0 0.0
        %539 = vmatprep.subr.mxu0 0.0
        %540 = vmatpush1.msra.mxu0 0.0
        %541 = vmatprep.subr.mxu0 0.0
        %542 = vmatpush1.msra.mxu0 0.0
        %543 = vmatprep.subr.mxu0 0.0
        %544 = vmatpush1.msra.mxu0 0.0
        %545 = vmatprep.subr.mxu0 0.0
        %546 = vmatpush1.msra.mxu0 0.0
        %547 = vmatprep.subr.mxu0 0.0
        %548 = vmatpush1.msra.mxu0 0.0
        %549 = vmatprep.subr.mxu0 0.0
        %550 = vmatpush1.msra.mxu0 0.0
        %551 = vmatprep.subr.mxu0 0.0
        %552 = vmatpush1.msra.mxu0 0.0
        %553 = vmatprep.subr.mxu0 0.0
        %554 = vmatpush1.msra.mxu0 0.0
        %555 = vmatprep.subr.mxu0 0.0
        %556 = vmatpush1.msra.mxu0 0.0
        %557 = vmatprep.subr.mxu0 0.0
        %558 = vmatpush1.msra.mxu0 0.0
        %559 = vmatprep.subr.mxu0 0.0
        %560 = vmatpush1.msra.mxu0 0.0
        %561 = vmatprep.subr.mxu0 0.0
        %562 = vmatpush1.msra.mxu0 0.0
        %563 = vmatprep.subr.mxu0 0.0
        %564 = vmatpush1.msra.mxu0 0.0
        %565 = vmatprep.subr.mxu0 0.0
        %566 = vmatpush1.msra.mxu0 0.0
        %567 = vmatprep.subr.mxu0 0.0
        %568 = vmatpush1.msra.mxu0 0.0
        %569 = vmatprep.mubr.f32.mxu0 0.0
        %570 = vmatmul.mubr.f32.gmra.mrb[0].mxu0 %v503
        %v571 = vpop.f32.mrb[0].mxu0
        %v572 = vadd.f32 %v499, %v571
        %v573 = vpop.f32.mrb[0].mxu0
        %574 = vdwg.mxu0
        %v575 = vmax.f32 %v572, 0.0
        %576 = vmatprep.subr.mxu0 0.0
        %577 = vmatpush1.msra.mxu0 %v575
        %578 = vmatprep.subr.mxu0 0.0
        %579 = vmatpush1.msra.mxu0 0.0
        %580 = vmatprep.subr.mxu0 0.0
        %581 = vmatpush1.msra.mxu0 0.0
        %582 = vmatprep.subr.mxu0 0.0
        %583 = vmatpush1.msra.mxu0 0.0
        %584 = vmatprep.subr.mxu0 0.0
        %585 = vmatpush1.msra.mxu0 0.0
        %586 = vmatprep.subr.mxu0 0.0
        %587 = vmatpush1.msra.mxu0 0.0
        %588 = vmatprep.subr.mxu0 0.0
        %589 = vmatpush1.msra.mxu0 0.0
        %590 = vmatprep.subr.mxu0 0.0
        %591 = vmatpush1.msra.mxu0 0.0
        %592 = vmatprep.subr.mxu0 0.0
        %593 = vmatpush1.msra.mxu0 0.0
        %594 = vmatprep.subr.mxu0 0.0
        %595 = vmatpush1.msra.mxu0 0.0
        %596 = vmatprep.subr.mxu0 0.0
        %597 = vmatpush1.msra.mxu0 0.0
        %598 = vmatprep.subr.mxu0 0.0
        %599 = vmatpush1.msra.mxu0 0.0
        %600 = vmatprep.subr.mxu0 0.0
        %601 = vmatpush1.msra.mxu0 0.0
        %602 = vmatprep.subr.mxu0 0.0
        %603 = vmatpush1.msra.mxu0 0.0
        %604 = vmatprep.subr.mxu0 0.0
        %605 = vmatpush1.msra.mxu0 0.0
        %606 = vmatprep.subr.mxu0 0.0
        %607 = vmatpush1.msra.mxu0 0.0
        %608 = vmatprep.subr.mxu0 0.0
        %609 = vmatpush1.msra.mxu0 0.0
        %610 = vmatprep.subr.mxu0 0.0
        %611 = vmatpush1.msra.mxu0 0.0
        %612 = vmatprep.subr.mxu0 0.0
        %613 = vmatpush1.msra.mxu0 0.0
        %614 = vmatprep.subr.mxu0 0.0
        %615 = vmatpush1.msra.mxu0 0.0
        %616 = vmatprep.subr.mxu0 0.0
        %617 = vmatpush1.msra.mxu0 0.0
        %618 = vmatprep.subr.mxu0 0.0
        %619 = vmatpush1.msra.mxu0 0.0
        %620 = vmatprep.subr.mxu0 0.0
        %621 = vmatpush1.msra.mxu0 0.0
        %622 = vmatprep.subr.mxu0 0.0
        %623 = vmatpush1.msra.mxu0 0.0
        %624 = vmatprep.subr.mxu0 0.0
        %625 = vmatpush1.msra.mxu0 0.0
        %626 = vmatprep.subr.mxu0 0.0
        %627 = vmatpush1.msra.mxu0 0.0
        %628 = vmatprep.subr.mxu0 0.0
        %629 = vmatpush1.msra.mxu0 0.0
        %630 = vmatprep.subr.mxu0 0.0
        %631 = vmatpush1.msra.mxu0 0.0
        %632 = vmatprep.subr.mxu0 0.0
        %633 = vmatpush1.msra.mxu0 0.0
        %634 = vmatprep.subr.mxu0 0.0
        %635 = vmatpush1.msra.mxu0 0.0
        %636 = vmatprep.subr.mxu0 0.0
        %637 = vmatpush1.msra.mxu0 0.0
        %638 = vmatprep.subr.mxu0 0.0
        %639 = vmatpush1.msra.mxu0 0.0
        %640 = vmatprep.mubr.f32.mxu0 0.0
        %641 = vmatmul.mubr.f32.gmra.mrb[0].mxu0 %v420
        %v642 = vpop.f32.mrb[0].mxu0
        %v643 = vadd.f32 0.0, %v642
        %v644 = vpop.f32.mrb[0].mxu0
        %645 = vdwg.mxu0
        %v646 = vld [vmem:[%s392] sm:$0xff]
        %v647 = vld [vmem:[%s392 + $0x8] sm:$0xff]
        %v648 = vld [vmem:[%s392 + $0x10] sm:$0xff]
        %v649 = vld [vmem:[%s392 + $0x18] sm:$0xff]
        %v650 = vld [vmem:[%s395] sm:$0x1]
        %v652 = vlaneseq
        %v653 = vshrl.u32 %v652, 7
        %v654 = vsub.s32 0, %v653
        %v655 = vrot.slane %v650, %v654
        %vm657 = vcmask 261120
        %v659 = vsel %vm657, %v643, 0
        %661 = vmatprep.subr.mxu0 0.0
        %662 = vmatpush1.msra.mxu0 %v646
        %663 = vmatprep.subr.mxu0 0.0
        %664 = vmatpush1.msra.mxu0 %v647
        %665 = vmatprep.subr.mxu0 0.0
        %666 = vmatpush1.msra.mxu0 %v648
        %667 = vmatprep.subr.mxu0 0.0
        %668 = vmatpush1.msra.mxu0 %v649
        %669 = vmatprep.subr.mxu0 0.0
        %670 = vmatpush1.msra.mxu0 0.0
        %671 = vmatprep.subr.mxu0 0.0
        %672 = vmatpush1.msra.mxu0 0.0
        %673 = vmatprep.subr.mxu0 0.0
        %674 = vmatpush1.msra.mxu0 0.0
        %675 = vmatprep.subr.mxu0 0.0
        %676 = vmatpush1.msra.mxu0 0.0
        %677 = vmatprep.subr.mxu0 0.0
        %678 = vmatpush1.msra.mxu0 0.0
        %679 = vmatprep.subr.mxu0 0.0
        %680 = vmatpush1.msra.mxu0 0.0
        %681 = vmatprep.subr.mxu0 0.0
        %682 = vmatpush1.msra.mxu0 0.0
        %683 = vmatprep.subr.mxu0 0.0
        %684 = vmatpush1.msra.mxu0 0.0
        %685 = vmatprep.subr.mxu0 0.0
        %686 = vmatpush1.msra.mxu0 0.0
        %687 = vmatprep.subr.mxu0 0.0
        %688 = vmatpush1.msra.mxu0 0.0
        %689 = vmatprep.subr.mxu0 0.0
        %690 = vmatpush1.msra.mxu0 0.0
        %691 = vmatprep.subr.mxu0 0.0
        %692 = vmatpush1.msra.mxu0 0.0
        %693 = vmatprep.subr.mxu0 0.0
        %694 = vmatpush1.msra.mxu0 0.0
        %695 = vmatprep.subr.mxu0 0.0
        %696 = vmatpush1.msra.mxu0 0.0
        %697 = vmatprep.subr.mxu0 0.0
        %698 = vmatpush1.msra.mxu0 0.0
        %699 = vmatprep.subr.mxu0 0.0
        %700 = vmatpush1.msra.mxu0 0.0
        %701 = vmatprep.subr.mxu0 0.0
        %702 = vmatpush1.msra.mxu0 0.0
        %703 = vmatprep.subr.mxu0 0.0
        %704 = vmatpush1.msra.mxu0 0.0
        %705 = vmatprep.subr.mxu0 0.0
        %706 = vmatpush1.msra.mxu0 0.0
        %707 = vmatprep.subr.mxu0 0.0
        %708 = vmatpush1.msra.mxu0 0.0
        %709 = vmatprep.subr.mxu0 0.0
        %710 = vmatpush1.msra.mxu0 0.0
        %711 = vmatprep.subr.mxu0 0.0
        %712 = vmatpush1.msra.mxu0 0.0
        %713 = vmatprep.subr.mxu0 0.0
        %714 = vmatpush1.msra.mxu0 0.0
        %715 = vmatprep.subr.mxu0 0.0
        %716 = vmatpush1.msra.mxu0 0.0
        %717 = vmatprep.subr.mxu0 0.0
        %718 = vmatpush1.msra.mxu0 0.0
        %719 = vmatprep.subr.mxu0 0.0
        %720 = vmatpush1.msra.mxu0 0.0
        %721 = vmatprep.subr.mxu0 0.0
        %722 = vmatpush1.msra.mxu0 0.0
        %723 = vmatprep.subr.mxu0 0.0
        %724 = vmatpush1.msra.mxu0 0.0
        %725 = vmatprep.mubr.f32.mxu0 0.0
        %726 = vmatmul.mubr.f32.gmra.mrb[0].mxu0 %v659
        %v727 = vpop.f32.mrb[0].mxu0
        %v728 = vadd.f32 %v655, %v727
        %v729 = vpop.f32.mrb[0].mxu0
        %730 = vdwg.mxu0
        %v731 = vmax.f32 %v728, 0.0
        %v732 = vld [vmem:[%s400] sm:$0xff]
        %v733 = vld [vmem:[%s400 + $0x8] sm:$0xff]
        %v734 = vld [vmem:[%s400 + $0x10] sm:$0xff]
        %v735 = vld [vmem:[%s400 + $0x18] sm:$0xff]
        %v737 = vsel %vm657, %v731, 0
        %739 = vmatprep.subr.mxu0 0.0
        %740 = vmatpush1.msra.mxu0 %v732
        %741 = vmatprep.subr.mxu0 0.0
        %742 = vmatpush1.msra.mxu0 %v733
        %743 = vmatprep.subr.mxu0 0.0
        %744 = vmatpush1.msra.mxu0 %v734
        %745 = vmatprep.subr.mxu0 0.0
        %746 = vmatpush1.msra.mxu0 %v735
        %747 = vmatprep.subr.mxu0 0.0
        %748 = vmatpush1.msra.mxu0 0.0
        %749 = vmatprep.subr.mxu0 0.0
        %750 = vmatpush1.msra.mxu0 0.0
        %751 = vmatprep.subr.mxu0 0.0
        %752 = vmatpush1.msra.mxu0 0.0
        %753 = vmatprep.subr.mxu0 0.0
        %754 = vmatpush1.msra.mxu0 0.0
        %755 = vmatprep.subr.mxu0 0.0
        %756 = vmatpush1.msra.mxu0 0.0
        %757 = vmatprep.subr.mxu0 0.0
        %758 = vmatpush1.msra.mxu0 0.0
        %759 = vmatprep.subr.mxu0 0.0
        %760 = vmatpush1.msra.mxu0 0.0
        %761 = vmatprep.subr.mxu0 0.0
        %762 = vmatpush1.msra.mxu0 0.0
        %763 = vmatprep.subr.mxu0 0.0
        %764 = vmatpush1.msra.mxu0 0.0
        %765 = vmatprep.subr.mxu0 0.0
        %766 = vmatpush1.msra.mxu0 0.0
        %767 = vmatprep.subr.mxu0 0.0
        %768 = vmatpush1.msra.mxu0 0.0
        %769 = vmatprep.subr.mxu0 0.0
        %770 = vmatpush1.msra.mxu0 0.0
        %771 = vmatprep.subr.mxu0 0.0
        %772 = vmatpush1.msra.mxu0 0.0
        %773 = vmatprep.subr.mxu0 0.0
        %774 = vmatpush1.msra.mxu0 0.0
        %775 = vmatprep.subr.mxu0 0.0
        %776 = vmatpush1.msra.mxu0 0.0
        %777 = vmatprep.subr.mxu0 0.0
        %778 = vmatpush1.msra.mxu0 0.0
        %779 = vmatprep.subr.mxu0 0.0
        %780 = vmatpush1.msra.mxu0 0.0
        %781 = vmatprep.subr.mxu0 0.0
        %782 = vmatpush1.msra.mxu0 0.0
        %783 = vmatprep.subr.mxu0 0.0
        %784 = vmatpush1.msra.mxu0 0.0
        %785 = vmatprep.subr.mxu0 0.0
        %786 = vmatpush1.msra.mxu0 0.0
        %787 = vmatprep.subr.mxu0 0.0
        %788 = vmatpush1.msra.mxu0 0.0
        %789 = vmatprep.subr.mxu0 0.0
        %790 = vmatpush1.msra.mxu0 0.0
        %791 = vmatprep.subr.mxu0 0.0
        %792 = vmatpush1.msra.mxu0 0.0
        %793 = vmatprep.subr.mxu0 0.0
        %794 = vmatpush1.msra.mxu0 0.0
        %795 = vmatprep.subr.mxu0 0.0
        %796 = vmatpush1.msra.mxu0 0.0
        %797 = vmatprep.subr.mxu0 0.0
        %798 = vmatpush1.msra.mxu0 0.0
        %799 = vmatprep.subr.mxu0 0.0
        %800 = vmatpush1.msra.mxu0 0.0
        %801 = vmatprep.subr.mxu0 0.0
        %802 = vmatpush1.msra.mxu0 0.0
        %803 = vmatprep.mubr.f32.mxu0 0.0
        %804 = vmatmul.mubr.f32.gmra.mrb[0].mxu0 %v737
        %v805 = vpop.f32.mrb[0].mxu0
        %v806 = vadd.f32 0.0, %v805
        %v807 = vpop.f32.mrb[0].mxu0
        %808 = vdwg.mxu0
        %v809 = vld [vmem:[%s405] sm:$0xff]
        %v810 = vld [vmem:[%s405 + $0x8] sm:$0xff]
        %v811 = vld [vmem:[%s405 + $0x10] sm:$0xff]
        %v812 = vld [vmem:[%s405 + $0x18] sm:$0xff]
        %813 = vmatprep.subr.mxu0 0.0
        %814 = vmatpush1.msra.mxu0 %v809
        %815 = vmatprep.subr.mxu0 0.0
        %816 = vmatpush1.msra.mxu0 %v810
        %817 = vmatprep.subr.mxu0 0.0
        %818 = vmatpush1.msra.mxu0 %v811
        %819 = vmatprep.subr.mxu0 0.0
        %820 = vmatpush1.msra.mxu0 %v812
        %821 = vmatprep.subr.mxu0 0.0
        %822 = vmatpush1.msra.mxu0 0.0
        %823 = vmatprep.subr.mxu0 0.0
        %824 = vmatpush1.msra.mxu0 0.0
        %825 = vmatprep.subr.mxu0 0.0
        %826 = vmatpush1.msra.mxu0 0.0
        %827 = vmatprep.subr.mxu0 0.0
        %828 = vmatpush1.msra.mxu0 0.0
        %829 = vmatprep.subr.mxu0 0.0
        %830 = vmatpush1.msra.mxu0 0.0
        %831 = vmatprep.subr.mxu0 0.0
        %832 = vmatpush1.msra.mxu0 0.0
        %833 = vmatprep.subr.mxu0 0.0
        %834 = vmatpush1.msra.mxu0 0.0
        %835 = vmatprep.subr.mxu0 0.0
        %836 = vmatpush1.msra.mxu0 0.0
        %837 = vmatprep.subr.mxu0 0.0
        %838 = vmatpush1.msra.mxu0 0.0
        %839 = vmatprep.subr.mxu0 0.0
        %840 = vmatpush1.msra.mxu0 0.0
        %841 = vmatprep.subr.mxu0 0.0
        %842 = vmatpush1.msra.mxu0 0.0
        %843 = vmatprep.subr.mxu0 0.0
        %844 = vmatpush1.msra.mxu0 0.0
        %845 = vmatprep.subr.mxu0 0.0
        %846 = vmatpush1.msra.mxu0 0.0
        %847 = vmatprep.subr.mxu0 0.0
        %848 = vmatpush1.msra.mxu0 0.0
        %849 = vmatprep.subr.mxu0 0.0
        %850 = vmatpush1.msra.mxu0 0.0
        %851 = vmatprep.subr.mxu0 0.0
        %852 = vmatpush1.msra.mxu0 0.0
        %853 = vmatprep.subr.mxu0 0.0
        %854 = vmatpush1.msra.mxu0 0.0
        %855 = vmatprep.subr.mxu0 0.0
        %856 = vmatpush1.msra.mxu0 0.0
        %857 = vmatprep.subr.mxu0 0.0
        %858 = vmatpush1.msra.mxu0 0.0
        %859 = vmatprep.subr.mxu0 0.0
        %860 = vmatpush1.msra.mxu0 0.0
        %861 = vmatprep.subr.mxu0 0.0
        %862 = vmatpush1.msra.mxu0 0.0
        %863 = vmatprep.subr.mxu0 0.0
        %864 = vmatpush1.msra.mxu0 0.0
        %865 = vmatprep.subr.mxu0 0.0
        %866 = vmatpush1.msra.mxu0 0.0
        %867 = vmatprep.subr.mxu0 0.0
        %868 = vmatpush1.msra.mxu0 0.0
        %869 = vmatprep.subr.mxu0 0.0
        %870 = vmatpush1.msra.mxu0 0.0
        %871 = vmatprep.subr.mxu0 0.0
        %872 = vmatpush1.msra.mxu0 0.0
        %873 = vmatprep.subr.mxu0 0.0
        %874 = vmatpush1.msra.mxu0 0.0
        %875 = vmatprep.subr.mxu0 0.0
        %876 = vmatpush1.msra.mxu0 0.0
        %877 = vmatprep.mubr.f32.mxu0 0.0
        %878 = vmatmul.mubr.f32.gmra.mrb[0].mxu0 %v737
        %v879 = vpop.f32.mrb[0].mxu0
        %v880 = vadd.f32 0.0, %v879
        %v881 = vpop.f32.mrb[0].mxu0
        %882 = vdwg.mxu0
        %v883 = vsub.f32 %v417, %v806
        %884 = vst.msk [vmem:[#allocation2] sm:$0xff] %vm501, %v883
        %v885 = vld [vmem:[#allocation3] sm:$0xff]
        %v886 = vadd.f32 %v885, %v806
        %887 = vst.msk [vmem:[#allocation3] sm:$0xff] %vm501, %v886
        %v888 = vld [vmem:[#allocation5] sm:$0xff]
        %v889 = vadd.f32 %v888, %v880
        %890 = vst.msk [vmem:[#allocation5] sm:$0xff] %vm418, %v889
        // Predicated region
        $region57: #{n_model_forward.1} parent=51 // pred_check
          %p891 = pneg %p234
        $region58: #{n_model_forward.1} parent=51 // pred_check_branch
          %893 = sbr.rel (%p891) target = $region60
        $region59: #{n_model_forward.1} parent=51 // pred_region
          %s895 = ssub.s32 128, 128
          %896 = vsyncadd [#allocation4], %s895
          %s898 = sshll.u32 [#allocation3], 4
          %s899 = int_to_ptr.vmem [resolvable:$true] %s898
          %901 = dma.vmem_to_hbm [thread:$0]  %s899, 128, %s8, [#allocation4]
        $region60: #{n_model_forward.1} parent=51 // pred_fallthru
          _
        // Predicated region
        $region61: #{n_model_forward.1} parent=51 // pred_check
          %p902 = pneg %p255
        $region62: #{n_model_forward.1} parent=51 // pred_check_branch
          %904 = sbr.rel (%p902) target = $region64
        $region63: #{n_model_forward.1} parent=51 // pred_region
          %s906 = ssub.s32 128, 128
          %907 = vsyncadd [#allocation6], %s906
          %s909 = sshll.u32 [#allocation5], 4
          %s910 = int_to_ptr.vmem [resolvable:$true] %s909
          %912 = dma.vmem_to_hbm [thread:$0]  %s910, 128, %s9, [#allocation6]
        $region64: #{n_model_forward.1} parent=51 // pred_fallthru
          _
        // Predicated region
        $region65: #{n_model_forward.1} parent=51 // pred_check
          %p913 = pneg %p234
        $region66: #{n_model_forward.1} parent=51 // pred_check_branch
          %915 = sbr.rel (%p913) target = $region68
        $region67: #{n_model_forward.1} parent=51 // pred_region
          %916 = dma.done [#allocation4], 128
        $region68: #{n_model_forward.1} parent=51 // pred_fallthru
          _
        // Predicated region
        $region69: #{n_model_forward.1} parent=51 // pred_check
          %p917 = pneg %p255
        $region70: #{n_model_forward.1} parent=51 // pred_check_branch
          %919 = sbr.rel (%p917) target = $region72
        $region71: #{n_model_forward.1} parent=51 // pred_region
          %920 = dma.done [#allocation6], 128
        $region72: #{n_model_forward.1} parent=51 // pred_fallthru
          _
      $region52: #{n_model_forward.1} parent=5 // pred_fallthru
        _
      %p921 = scmp.le.s32.totalorder 2, %s18
      // Predicated region
      $region73: #{n_model_forward.1} parent=5 // pred_check
        %p922 = pneg %p921
      $region74: #{n_model_forward.1} parent=5 // pred_check_branch
        %924 = sbr.rel (%p922) target = $region76
      $region75: #{n_model_forward.1} parent=5 // pred_region
        %s925 = ssub.s32 %s18, 2
      $region76: #{n_model_forward.1} parent=5 // pred_fallthru
        _
    $region6: #{n_model_forward.1} parent=1 // loop_footer
      %s22 = sadd.s32 1, %s18
    $region7: #{n_model_forward.1} parent=1 // loop_footer_branch
      %17 = sbr.rel target = $region3
    $region8: #{n_model_forward.1} parent=1 // loop_exit
      _
    %926 = vsyncpa [#allocation4], 1
    %s927 = scalar_lea.sflag [#allocation4], 1
    %928 = vsyncpa %s927, 1
    %929 = vsyncpa [#allocation6], 1

</llo_original>
